<compile_context>
chip_gen: v5e
topology: v5e:2x2
jax: 0.10.0
libtpu: 0.0.40
codegen_flags: <defaults>
</compile_context>

<pallas_src>
import jax
import jax.numpy as jnp
from jax.experimental import pallas as pl
from jax.experimental.pallas import tpu as pltpu

N_OUT = 6          # true number of model outputs
HEAD_PAD = 128     # head weight padded to 128 cols so the last matmul is lane-dense
BN_EPS = 1e-5


# ----------------------------------------------------------------------------
# Kernel: whole MLP forward for one batch tile.
# ----------------------------------------------------------------------------
def _mlp_kernel(x_ref,
                w1_ref, b1_ref,
                w2_ref, b2_ref,
                w3_ref, b3_ref,
                wo_ref, bo_ref,
                out_ref):
    cdt = w1_ref.dtype  # bf16 matmul operand dtype

    # fc1 (+ folded bn1) -> relu   (dropout is identity in eval mode)
    # x arrives as f32; the bf16 cast is fused into the kernel here.
    h = jnp.dot(x_ref[...].astype(cdt), w1_ref[...],
                preferred_element_type=jnp.float32)
    h = jnp.maximum(h + b1_ref[...], 0.0)

    # fc2 (+ folded bn2) -> relu
    h = jnp.dot(h.astype(cdt), w2_ref[...], preferred_element_type=jnp.float32)
    h = jnp.maximum(h + b2_ref[...], 0.0)

    # fc3 (+ folded bn3) -> relu
    h = jnp.dot(h.astype(cdt), w3_ref[...], preferred_element_type=jnp.float32)
    h = jnp.maximum(h + b3_ref[...], 0.0)

    # output head: lane-dense matmul against the 128-col zero-padded weight,
    # then slice to the 6 real columns in-vreg and store the narrow result.
    out = jnp.dot(h.astype(cdt), wo_ref[...], preferred_element_type=jnp.float32)
    out_ref[...] = (out[:, :N_OUT] + bo_ref[...]).astype(out_ref.dtype)


# ----------------------------------------------------------------------------
# Wrapper
# ----------------------------------------------------------------------------
def _choose_batch_tile(B, batch_tile):
    # batch_tile must be a multiple of 8 so partial-grid tiles keep a legal
    # (8, 128)-divisible (or full-extent) second-to-last block dim.
    assert batch_tile % 8 == 0
    # Single full-size tile whenever B fits (no forced multi-step grid on
    # single-TC v5e/v6e; large B still yields multiple "parallel" steps).
    return min(batch_tile, B)


def multi_output_crime_model(x, packed_params, *, batch_tile=4096):
    """Full MLP forward in one Pallas kernel, tiled over the batch dimension.

    `packed_params` = (w1, b1, w2, b2, w3, b3, wo, bo) with BN folded in.
    Weights are (in_features, out_features) bf16; biases are (1, out) f32.
    The head weight `wo` is zero-padded to HEAD_PAD columns; `bo` is (1, 6).
    """
    B, D_in = x.shape
    w1, b1, w2, b2, w3, b3, wo, bo = packed_params

    tb = _choose_batch_tile(B, batch_tile)
    grid = (pl.cdiv(B, tb),)

    row = lambda i: (i, 0)     # batch-tiled activations / output
    full = lambda i: (0, 0)    # grid-invariant parameter blocks (no re-fetch)

    in_specs = [pl.BlockSpec((tb, D_in), row)]
    for p in packed_params:
        in_specs.append(pl.BlockSpec(p.shape, full))

    # Real traffic: f32 x in, f32 (B, 6) out, each parameter streamed once.
    flops = 2 * B * (D_in * 256 + 256 * 128 + 128 * 64 + 64 * HEAD_PAD)
    param_bytes = sum(int(p.size) * p.dtype.itemsize for p in packed_params)
    bytes_accessed = B * D_in * 4 + B * N_OUT * 4 + param_bytes

    # NOTE: if B is not a multiple of tb, the partial last tile reads
    # out-of-bounds garbage rows into the matmuls; the clipped store keeps the
    # visible result correct (garbage rows are never written back).
    out = pl.pallas_call(
        _mlp_kernel,
        out_shape=jax.ShapeDtypeStruct((B, N_OUT), jnp.float32),
        grid_spec=pltpu.PrefetchScalarGridSpec(
            num_scalar_prefetch=0,
            grid=grid,
            in_specs=in_specs,
            out_specs=pl.BlockSpec((tb, N_OUT), row),
        ),
        compiler_params=pltpu.CompilerParams(
            dimension_semantics=("parallel",)),
        cost_estimate=pl.CostEstimate(
            flops=flops, transcendentals=0, bytes_accessed=bytes_accessed),
    )(x, *packed_params)

    return out


# ----------------------------------------------------------------------------
# Parameter construction (PyTorch-equivalent shapes, then fold / pad / cast).
# ----------------------------------------------------------------------------
def init_raw_params(key, input_size):
    """PyTorch-style init: Linear U(-1/sqrt(fan_in), ...), BN at defaults."""
    dims = [(input_size, 256), (256, 128), (128, 64), (64, N_OUT)]
    keys = jax.random.split(key, 2 * len(dims))
    layers = []
    for li, (din, dout) in enumerate(dims):
        bound = 1.0 / jnp.sqrt(jnp.float32(din))
        layer = {
            "w": jax.random.uniform(keys[2 * li], (din, dout), jnp.float32,
                                    -bound, bound),
            "b": jax.random.uniform(keys[2 * li + 1], (dout,), jnp.float32,
                                    -bound, bound),
        }
        if li < 3:  # BatchNorm1d(dout): gamma=1, beta=0, running_mean=0, running_var=1
            layer.update({
                "gamma": jnp.ones((dout,), jnp.float32),
                "beta": jnp.zeros((dout,), jnp.float32),
                "mean": jnp.zeros((dout,), jnp.float32),
                "var": jnp.ones((dout,), jnp.float32),
            })
        layers.append(layer)
    return layers


def fold_and_pack_params(raw_layers, *, compute_dtype=jnp.bfloat16):
    """Fold BN into Linear, pad the head weight to HEAD_PAD columns, cast to bf16.

    BN folding happens in f32 before the bf16 cast; results therefore match a
    bf16-quantized model, not a bit-exact f32 PyTorch model.
    """
    packed = []
    n_layers = len(raw_layers)
    for li, layer in enumerate(raw_layers):
        w, b = layer["w"], layer["b"]
        if "gamma" in layer:
            scale = layer["gamma"] / jnp.sqrt(layer["var"] + BN_EPS)
            shift = layer["beta"] - layer["mean"] * scale
            w = w * scale[None, :]
            b = b * scale + shift
        if li == n_layers - 1:  # zero-pad head weight 6 -> 128 cols (bias stays 6)
            w = jnp.pad(w, ((0, 0), (0, HEAD_PAD - w.shape[1])))
        packed.append(w.astype(compute_dtype))
        packed.append(b.reshape(1, -1).astype(jnp.float32))  # bias stays f32
    return tuple(packed)


def reference_forward(x, packed_params):
    """Pure-JAX reference using the exact same quantization as the kernel."""
    w1, b1, w2, b2, w3, b3, wo, bo = packed_params
    cdt = w1.dtype
    h = x.astype(cdt)
    for w, b in ((w1, b1), (w2, b2), (w3, b3)):
        h = jnp.dot(h, w, preferred_element_type=jnp.float32) + b
        h = jnp.maximum(h, 0.0).astype(cdt)
    out = jnp.dot(h, wo, preferred_element_type=jnp.float32)[:, :N_OUT] + bo
    return out


if __name__ == "__main__":
    key = jax.random.PRNGKey(0)
    k_x, k_p = jax.random.split(key)

    batch = 64
    input_size = 32
    x = jax.random.normal(k_x, (batch, input_size), jnp.float32)

    raw = init_raw_params(k_p, input_size)
    packed = fold_and_pack_params(raw)

    out = multi_output_crime_model(x, packed)
    out = jax.block_until_ready(out)

    ref = reference_forward(x, packed)
    assert out.shape == (batch, N_OUT)
    assert jnp.allclose(out, ref, atol=1e-3, rtol=1e-3), "mismatch vs reference"

    print("KERNEL_OK")
</pallas_src>

<mosaic_0001>
module attributes {stable_mosaic.version = 11 : i64} {
  func.func @_mlp_kernel(%arg0: i32, %arg1: memref<64x32xf32, #tpu.memory_space<vmem>>, %arg2: memref<32x256xbf16, #tpu.memory_space<vmem>>, %arg3: memref<1x256xf32, #tpu.memory_space<vmem>>, %arg4: memref<256x128xbf16, #tpu.memory_space<vmem>>, %arg5: memref<1x128xf32, #tpu.memory_space<vmem>>, %arg6: memref<128x64xbf16, #tpu.memory_space<vmem>>, %arg7: memref<1x64xf32, #tpu.memory_space<vmem>>, %arg8: memref<64x128xbf16, #tpu.memory_space<vmem>>, %arg9: memref<1x6xf32, #tpu.memory_space<vmem>>, %arg10: memref<64x6xf32, #tpu.memory_space<vmem>>) attributes {dimension_semantics = [#tpu.dimension_semantics<parallel>], iteration_bounds = array<i64: 1>, scalar_prefetch = 0 : i64, scratch_operands = 0 : i64, tpu.core_type = #tpu.core_type<tc>, window_params = [{transform_indices = @transform_0, window_bounds = array<i64: 64, 32>}, {pipeline_mode = #tpu.pipeline_mode<synchronous>, transform_indices = @transform_1, window_bounds = array<i64: 32, 256>}, {pipeline_mode = #tpu.pipeline_mode<synchronous>, transform_indices = @transform_2, window_bounds = array<i64: 1, 256>}, {pipeline_mode = #tpu.pipeline_mode<synchronous>, transform_indices = @transform_3, window_bounds = array<i64: 256, 128>}, {pipeline_mode = #tpu.pipeline_mode<synchronous>, transform_indices = @transform_4, window_bounds = array<i64: 1, 128>}, {pipeline_mode = #tpu.pipeline_mode<synchronous>, transform_indices = @transform_5, window_bounds = array<i64: 128, 64>}, {pipeline_mode = #tpu.pipeline_mode<synchronous>, transform_indices = @transform_6, window_bounds = array<i64: 1, 64>}, {pipeline_mode = #tpu.pipeline_mode<synchronous>, transform_indices = @transform_7, window_bounds = array<i64: 64, 128>}, {pipeline_mode = #tpu.pipeline_mode<synchronous>, transform_indices = @transform_8, window_bounds = array<i64: 1, 6>}, {transform_indices = @transform_9, window_bounds = array<i64: 64, 6>}]} {
    %c0 = arith.constant 0 : index
    %c0_0 = arith.constant 0 : index
    %0 = vector.load %arg1[%c0, %c0_0] : memref<64x32xf32, #tpu.memory_space<vmem>>, vector<64x32xf32>
    %1 = arith.truncf %0 : vector<64x32xf32> to vector<64x32xbf16>
    %c0_1 = arith.constant 0 : index
    %c0_2 = arith.constant 0 : index
    %2 = vector.load %arg2[%c0_1, %c0_2] : memref<32x256xbf16, #tpu.memory_space<vmem>>, vector<32x256xbf16>
    %cst = arith.constant dense<0.000000e+00> : vector<64x256xf32>
    %3 = tpu.matmul %1, %2, %cst {dimension_numbers = #tpu.dot_dimension_numbers<[1], [0], [0], [1], [0, 0, 1, 1], [], []>} : vector<64x32xbf16>, vector<32x256xbf16>, vector<64x256xf32> -> vector<64x256xf32>
    %c0_3 = arith.constant 0 : index
    %c0_4 = arith.constant 0 : index
    %4 = vector.load %arg3[%c0_3, %c0_4] : memref<1x256xf32, #tpu.memory_space<vmem>>, vector<1x256xf32>
    %5 = vector.broadcast %4 : vector<1x256xf32> to vector<64x256xf32>
    %6 = arith.addf %3, %5 : vector<64x256xf32>
    %cst_5 = arith.constant 0.000000e+00 : f32
    %7 = vector.broadcast %cst_5 : f32 to vector<64x256xf32>
    %8 = arith.maximumf %6, %7 : vector<64x256xf32>
    %9 = arith.truncf %8 : vector<64x256xf32> to vector<64x256xbf16>
    %c0_6 = arith.constant 0 : index
    %c0_7 = arith.constant 0 : index
    %10 = vector.load %arg4[%c0_6, %c0_7] : memref<256x128xbf16, #tpu.memory_space<vmem>>, vector<256x128xbf16>
    %cst_8 = arith.constant dense<0.000000e+00> : vector<64x128xf32>
    %11 = tpu.matmul %9, %10, %cst_8 {dimension_numbers = #tpu.dot_dimension_numbers<[1], [0], [0], [1], [0, 0, 1, 1], [], []>} : vector<64x256xbf16>, vector<256x128xbf16>, vector<64x128xf32> -> vector<64x128xf32>
    %c0_9 = arith.constant 0 : index
    %c0_10 = arith.constant 0 : index
    %12 = vector.load %arg5[%c0_9, %c0_10] : memref<1x128xf32, #tpu.memory_space<vmem>>, vector<1x128xf32>
    %13 = vector.broadcast %12 : vector<1x128xf32> to vector<64x128xf32>
    %14 = arith.addf %11, %13 : vector<64x128xf32>
    %cst_11 = arith.constant 0.000000e+00 : f32
    %15 = vector.broadcast %cst_11 : f32 to vector<64x128xf32>
    %16 = arith.maximumf %14, %15 : vector<64x128xf32>
    %17 = arith.truncf %16 : vector<64x128xf32> to vector<64x128xbf16>
    %c0_12 = arith.constant 0 : index
    %c0_13 = arith.constant 0 : index
    %18 = vector.load %arg6[%c0_12, %c0_13] : memref<128x64xbf16, #tpu.memory_space<vmem>>, vector<128x64xbf16>
    %cst_14 = arith.constant dense<0.000000e+00> : vector<64x64xf32>
    %19 = tpu.matmul %17, %18, %cst_14 {dimension_numbers = #tpu.dot_dimension_numbers<[1], [0], [0], [1], [0, 0, 1, 1], [], []>} : vector<64x128xbf16>, vector<128x64xbf16>, vector<64x64xf32> -> vector<64x64xf32>
    %c0_15 = arith.constant 0 : index
    %c0_16 = arith.constant 0 : index
    %20 = vector.load %arg7[%c0_15, %c0_16] : memref<1x64xf32, #tpu.memory_space<vmem>>, vector<1x64xf32>
    %21 = vector.broadcast %20 : vector<1x64xf32> to vector<64x64xf32>
    %22 = arith.addf %19, %21 : vector<64x64xf32>
    %cst_17 = arith.constant 0.000000e+00 : f32
    %23 = vector.broadcast %cst_17 : f32 to vector<64x64xf32>
    %24 = arith.maximumf %22, %23 : vector<64x64xf32>
    %25 = arith.truncf %24 : vector<64x64xf32> to vector<64x64xbf16>
    %c0_18 = arith.constant 0 : index
    %c0_19 = arith.constant 0 : index
    %26 = vector.load %arg8[%c0_18, %c0_19] : memref<64x128xbf16, #tpu.memory_space<vmem>>, vector<64x128xbf16>
    %cst_20 = arith.constant dense<0.000000e+00> : vector<64x128xf32>
    %27 = tpu.matmul %25, %26, %cst_20 {dimension_numbers = #tpu.dot_dimension_numbers<[1], [0], [0], [1], [0, 0, 1, 1], [], []>} : vector<64x64xbf16>, vector<64x128xbf16>, vector<64x128xf32> -> vector<64x128xf32>
    %28 = vector.extract_strided_slice %27 {offsets = [0, 0], sizes = [64, 6], strides = [1, 1]} : vector<64x128xf32> to vector<64x6xf32>
    %c0_21 = arith.constant 0 : index
    %c0_22 = arith.constant 0 : index
    %29 = vector.load %arg9[%c0_21, %c0_22] : memref<1x6xf32, #tpu.memory_space<vmem>>, vector<1x6xf32>
    %30 = vector.broadcast %29 : vector<1x6xf32> to vector<64x6xf32>
    %31 = arith.addf %28, %30 : vector<64x6xf32>
    %c0_23 = arith.constant 0 : index
    %c0_24 = arith.constant 0 : index
    %32 = vector.load %arg10[%c0_23, %c0_24] : memref<64x6xf32, #tpu.memory_space<vmem>>, vector<64x6xf32>
    tpu.vector_store %arg10[%c0_23, %c0_24], %31 {strides = array<i32>} : memref<64x6xf32, #tpu.memory_space<vmem>>, vector<64x6xf32>,
    return
  }
  func.func @transform_0(%arg0: i32) -> (i32, i32) {
    %c0_i32 = arith.constant 0 : i32
    %c0_i32_0 = arith.constant 0 : i32
    return %arg0, %c0_i32 : i32, i32
  }
  func.func @transform_1(%arg0: i32) -> (i32, i32) {
    %c0_i32 = arith.constant 0 : i32
    %c0_i32_0 = arith.constant 0 : i32
    %c0_i32_1 = arith.constant 0 : i32
    return %c0_i32, %c0_i32_0 : i32, i32
  }
  func.func @transform_2(%arg0: i32) -> (i32, i32) {
    %c0_i32 = arith.constant 0 : i32
    %c0_i32_0 = arith.constant 0 : i32
    %c0_i32_1 = arith.constant 0 : i32
    return %c0_i32, %c0_i32_0 : i32, i32
  }
  func.func @transform_3(%arg0: i32) -> (i32, i32) {
    %c0_i32 = arith.constant 0 : i32
    %c0_i32_0 = arith.constant 0 : i32
    %c0_i32_1 = arith.constant 0 : i32
    return %c0_i32, %c0_i32_0 : i32, i32
  }
  func.func @transform_4(%arg0: i32) -> (i32, i32) {
    %c0_i32 = arith.constant 0 : i32
    %c0_i32_0 = arith.constant 0 : i32
    %c0_i32_1 = arith.constant 0 : i32
    return %c0_i32, %c0_i32_0 : i32, i32
  }
  func.func @transform_5(%arg0: i32) -> (i32, i32) {
    %c0_i32 = arith.constant 0 : i32
    %c0_i32_0 = arith.constant 0 : i32
    %c0_i32_1 = arith.constant 0 : i32
    return %c0_i32, %c0_i32_0 : i32, i32
  }
  func.func @transform_6(%arg0: i32) -> (i32, i32) {
    %c0_i32 = arith.constant 0 : i32
    %c0_i32_0 = arith.constant 0 : i32
    %c0_i32_1 = arith.constant 0 : i32
    return %c0_i32, %c0_i32_0 : i32, i32
  }
  func.func @transform_7(%arg0: i32) -> (i32, i32) {
    %c0_i32 = arith.constant 0 : i32
    %c0_i32_0 = arith.constant 0 : i32
    %c0_i32_1 = arith.constant 0 : i32
    return %c0_i32, %c0_i32_0 : i32, i32
  }
  func.func @transform_8(%arg0: i32) -> (i32, i32) {
    %c0_i32 = arith.constant 0 : i32
    %c0_i32_0 = arith.constant 0 : i32
    %c0_i32_1 = arith.constant 0 : i32
    return %c0_i32, %c0_i32_0 : i32, i32
  }
  func.func @transform_9(%arg0: i32) -> (i32, i32) {
    %c0_i32 = arith.constant 0 : i32
    %c0_i32_0 = arith.constant 0 : i32
    return %arg0, %c0_i32 : i32, i32
  }
}

</mosaic_0001>

<llo_original>
// kernel: tpu_custom_call.1
$region0: #{tpu_custom_call.1}
  #allocation0 [shape = 'u32[]', space=smem, size = 0x4, offset = 0x4, fixed_abs, tag = 'smem constant byte address 0x4 - core index']
  #allocation1 [shape = 'u32[72,128]{1,0:T(1,128)}', space=vmem, size = 0x9000, scoped, tag = 'internal scratch']
  %s0 = inlined_call_operand.vmem [shape: f32[64,32], index: 0, kind: input, shape index: {}]
  %s1 = inlined_call_operand.vmem [shape: bf16[32,256], index: 1, kind: input, shape index: {}]
  %s2 = inlined_call_operand.vmem [shape: f32[1,256], index: 2, kind: input, shape index: {}]
  %s3 = inlined_call_operand.vmem [shape: bf16[256,128], index: 3, kind: input, shape index: {}]
  %s4 = inlined_call_operand.hbm [shape: f32[1,128], index: 4, kind: input, shape index: {}]
  %s5 = inlined_call_operand.vmem [shape: bf16[128,64], index: 5, kind: input, shape index: {}]
  %s6 = inlined_call_operand.vmem [shape: f32[1,64], index: 6, kind: input, shape index: {}]
  %s7 = inlined_call_operand.vmem [shape: bf16[64,128], index: 7, kind: input, shape index: {}]
  %s8 = inlined_call_operand.vmem [shape: f32[1,6], index: 8, kind: input, shape index: {}]
  %s9 = inlined_call_operand.vmem [shape: f32[64,6], index: 9, kind: output, shape index: {}]
  %s10 = sld [smem:[#allocation0]]
  $region50: #{tpu_custom_call.1} parent=0
    _
  %s12 = ssub.s32 1, %s10
  %s13 = scalar_select 0, %s12, %s10
  $region1: #{tpu_custom_call.1} parent=0
    #allocation2 [shape = 'u8[512]{0}', space=vmem, size = 0x400, scoped, tag = 'input window, operand 4, single buffered']
    #allocation3 [shape = 's32[1]{0}', space=sflag, size = 0x4, scoped, tag = 'scoped memory for tpu_custom_call.1']
    %14 = vsyncpa [#allocation3], 0
    // Predicated region
    $region2: #{tpu_custom_call.1} parent=1 // pred_check
      _
    $region3: #{tpu_custom_call.1} parent=1 // pred_check_branch
      %16 = sbr.rel (0) target = $region5
    $region4: #{tpu_custom_call.1} parent=1 // pred_region
      _
    $region5: #{tpu_custom_call.1} parent=1 // pred_fallthru
      _
    // Predicated region
    $region6: #{tpu_custom_call.1} parent=1 // pred_check
      _
    $region7: #{tpu_custom_call.1} parent=1 // pred_check_branch
      %18 = sbr.rel (0) target = $region9
    $region8: #{tpu_custom_call.1} parent=1 // pred_region
      _
    $region9: #{tpu_custom_call.1} parent=1 // pred_fallthru
      _
    // Predicated region
    $region10: #{tpu_custom_call.1} parent=1 // pred_check
      _
    $region11: #{tpu_custom_call.1} parent=1 // pred_check_branch
      %20 = sbr.rel (0) target = $region13
    $region12: #{tpu_custom_call.1} parent=1 // pred_region
      _
    $region13: #{tpu_custom_call.1} parent=1 // pred_fallthru
      _
    // Predicated region
    $region14: #{tpu_custom_call.1} parent=1 // pred_check
      _
    $region15: #{tpu_custom_call.1} parent=1 // pred_check_branch
      %22 = sbr.rel (0) target = $region17
    $region16: #{tpu_custom_call.1} parent=1 // pred_region
      _
    $region17: #{tpu_custom_call.1} parent=1 // pred_fallthru
      _
    // Predicated region
    $region18: #{tpu_custom_call.1} parent=1 // pred_check
      _
    $region19: #{tpu_custom_call.1} parent=1 // pred_check_branch
      %24 = sbr.rel (0) target = $region21
    $region20: #{tpu_custom_call.1} parent=1 // pred_region
      %26 = vsyncadd [#allocation3], 0
      %s28 = sshll.u32 %s4, 4
      %s29 = int_to_ptr.hbm [resolvable:$true] %s28
      %s30 = sshll.u32 [#allocation2], 4
      %s31 = int_to_ptr.vmem [resolvable:$true] %s30
      %33 = dma.hbm_to_vmem [thread:$0]  %s29, 16, %s31, [#allocation3]
    $region21: #{tpu_custom_call.1} parent=1 // pred_fallthru
      _
    // Predicated region
    $region22: #{tpu_custom_call.1} parent=1 // pred_check
      _
    $region23: #{tpu_custom_call.1} parent=1 // pred_check_branch
      %35 = sbr.rel (0) target = $region25
    $region24: #{tpu_custom_call.1} parent=1 // pred_region
      _
    $region25: #{tpu_custom_call.1} parent=1 // pred_fallthru
      _
    // Predicated region
    $region26: #{tpu_custom_call.1} parent=1 // pred_check
      _
    $region27: #{tpu_custom_call.1} parent=1 // pred_check_branch
      %37 = sbr.rel (0) target = $region29
    $region28: #{tpu_custom_call.1} parent=1 // pred_region
      _
    $region29: #{tpu_custom_call.1} parent=1 // pred_fallthru
      _
    // Predicated region
    $region30: #{tpu_custom_call.1} parent=1 // pred_check
      _
    $region31: #{tpu_custom_call.1} parent=1 // pred_check_branch
      %39 = sbr.rel (0) target = $region33
    $region32: #{tpu_custom_call.1} parent=1 // pred_region
      _
    $region33: #{tpu_custom_call.1} parent=1 // pred_fallthru
      _
    // Predicated region
    $region34: #{tpu_custom_call.1} parent=1 // pred_check
      _
    $region35: #{tpu_custom_call.1} parent=1 // pred_check_branch
      %41 = sbr.rel (0) target = $region37
    $region36: #{tpu_custom_call.1} parent=1 // pred_region
      _
    $region37: #{tpu_custom_call.1} parent=1 // pred_fallthru
      _
    // Predicated region
    $region38: #{tpu_custom_call.1} parent=1 // pred_check
      _
    $region39: #{tpu_custom_call.1} parent=1 // pred_check_branch
      %43 = sbr.rel (0) target = $region41
    $region40: #{tpu_custom_call.1} parent=1 // pred_region
      %45 = dma.done [#allocation3], 16
    $region41: #{tpu_custom_call.1} parent=1 // pred_fallthru
      _
    %v47 = vld [vmem:[%s0] sm:$0xff]
    %v48 = vld [vmem:[%s0 + $0x8] sm:$0xff]
    %v49 = vld [vmem:[%s0 + $0x10] sm:$0xff]
    %v50 = vld [vmem:[%s0 + $0x18] sm:$0xff]
    %v51 = vld [vmem:[%s0 + $0x20] sm:$0xff]
    %v52 = vld [vmem:[%s0 + $0x28] sm:$0xff]
    %v53 = vld [vmem:[%s0 + $0x30] sm:$0xff]
    %v54 = vld [vmem:[%s0 + $0x38] sm:$0xff]
    %v55 = vpack.c.bf16 %v48, %v47
    %v56 = vpack.c.bf16 %v50, %v49
    %v57 = vpack.c.bf16 %v52, %v51
    %v58 = vpack.c.bf16 %v54, %v53
    %v59 = vld [vmem:[%s1] sm:$0xff]
    %v60 = vld [vmem:[%s1 + $0x8] sm:$0xff]
    %v61 = vld [vmem:[%s1 + $0x10] sm:$0xff]
    %v62 = vld [vmem:[%s1 + $0x18] sm:$0xff]
    %v63 = vld [vmem:[%s2] sm:$0x3]
    %v65 = vperm.slane %v63, 0
    %v66 = vperm.slane %v63, 1
    %v73 = vunpack.c.l.b16 %v59
    %v74 = vunpack.c.h.b16 %v59
    %v75 = vunpack.c.l.b16 %v60
    %v76 = vunpack.c.h.b16 %v60
    %v77 = vunpack.c.l.b16 %v61
    %v78 = vunpack.c.h.b16 %v61
    %v79 = vunpack.c.l.b16 %v62
    %v80 = vunpack.c.h.b16 %v62
    %v81 = vpack.c.b16 %v75, %v73
    %v82 = vpack.c.b16 %v76, %v74
    %v83 = vpack.c.b16 %v79, %v77
    %v84 = vpack.c.b16 %v80, %v78
    %vm89 = vcmask 261120
    %v91 = vsel %vm89, %v55, 0
    %v94 = vsel %vm89, %v56, 0
    %v97 = vsel %vm89, %v57, 0
    %v100 = vsel %vm89, %v58, 0
    %102 = vmatpush.bf16.msra.mxu0 0
    %103 = vmatpush.bf16.msra.mxu0 0
    %104 = vmatpush.bf16.msra.mxu0 0
    %105 = vmatpush.bf16.msra.mxu0 0
    %106 = vmatpush.bf16.msra.mxu0 0
    %107 = vmatpush.bf16.msra.mxu0 0
    %108 = vmatpush.bf16.msra.mxu0 %v83
    %109 = vmatpush.bf16.msra.mxu0 %v81
    %110 = vmatmul.bf16.gmra.mxu0 %v91
    %v111 = vpop.f32.mrf.mxu0
    %v112 = vadd.f32 %v65, %v111
    %v113 = vpop.f32.mrf.mxu0
    %v114 = vadd.f32 %v65, %v113
    %115 = vmatmul.bf16.gmra.mxu0 %v94
    %v116 = vpop.f32.mrf.mxu0
    %v117 = vadd.f32 %v65, %v116
    %v118 = vpop.f32.mrf.mxu0
    %v119 = vadd.f32 %v65, %v118
    %120 = vmatmul.bf16.gmra.mxu0 %v97
    %v121 = vpop.f32.mrf.mxu0
    %v122 = vadd.f32 %v65, %v121
    %v123 = vpop.f32.mrf.mxu0
    %v124 = vadd.f32 %v65, %v123
    %125 = vmatmul.bf16.gmra.mxu0 %v100
    %v126 = vpop.f32.mrf.mxu0
    %v127 = vadd.f32 %v65, %v126
    %v128 = vpop.f32.mrf.mxu0
    %v129 = vadd.f32 %v65, %v128
    %130 = vdwg.mxu0
    %131 = vmatpush.bf16.msra.mxu0 0
    %132 = vmatpush.bf16.msra.mxu0 0
    %133 = vmatpush.bf16.msra.mxu0 0
    %134 = vmatpush.bf16.msra.mxu0 0
    %135 = vmatpush.bf16.msra.mxu0 0
    %136 = vmatpush.bf16.msra.mxu0 0
    %137 = vmatpush.bf16.msra.mxu0 %v84
    %138 = vmatpush.bf16.msra.mxu0 %v82
    %139 = vmatmul.bf16.gmra.mxu0 %v91
    %v140 = vpop.f32.mrf.mxu0
    %v141 = vadd.f32 %v66, %v140
    %v142 = vpop.f32.mrf.mxu0
    %v143 = vadd.f32 %v66, %v142
    %144 = vmatmul.bf16.gmra.mxu0 %v94
    %v145 = vpop.f32.mrf.mxu0
    %v146 = vadd.f32 %v66, %v145
    %v147 = vpop.f32.mrf.mxu0
    %v148 = vadd.f32 %v66, %v147
    %149 = vmatmul.bf16.gmra.mxu0 %v97
    %v150 = vpop.f32.mrf.mxu0
    %v151 = vadd.f32 %v66, %v150
    %v152 = vpop.f32.mrf.mxu0
    %v153 = vadd.f32 %v66, %v152
    %154 = vmatmul.bf16.gmra.mxu0 %v100
    %v155 = vpop.f32.mrf.mxu0
    %v156 = vadd.f32 %v66, %v155
    %v157 = vpop.f32.mrf.mxu0
    %v158 = vadd.f32 %v66, %v157
    %159 = vdwg.mxu0
    %v160 = vmax.f32 %v112, 0.0
    %v161 = vmax.f32 %v141, 0.0
    %v162 = vmax.f32 %v114, 0.0
    %v163 = vmax.f32 %v143, 0.0
    %v164 = vmax.f32 %v117, 0.0
    %v165 = vmax.f32 %v146, 0.0
    %v166 = vmax.f32 %v119, 0.0
    %v167 = vmax.f32 %v148, 0.0
    %v168 = vmax.f32 %v122, 0.0
    %v169 = vmax.f32 %v151, 0.0
    %v170 = vmax.f32 %v124, 0.0
    %v171 = vmax.f32 %v153, 0.0
    %v172 = vmax.f32 %v127, 0.0
    %v173 = vmax.f32 %v156, 0.0
    %v174 = vmax.f32 %v129, 0.0
    %v175 = vmax.f32 %v158, 0.0
    %v176 = vpack.c.bf16 %v162, %v160
    %v177 = vpack.c.bf16 %v163, %v161
    %v178 = vpack.c.bf16 %v166, %v164
    %v179 = vpack.c.bf16 %v167, %v165
    %v180 = vpack.c.bf16 %v170, %v168
    %v181 = vpack.c.bf16 %v171, %v169
    %v182 = vpack.c.bf16 %v174, %v172
    %v183 = vpack.c.bf16 %v175, %v173
    %v184 = vld [vmem:[%s3] sm:$0xf]
    %v185 = vld [vmem:[%s3 + $0x4] sm:$0xf]
    %v186 = vld [vmem:[%s3 + $0x8] sm:$0xf]
    %v187 = vld [vmem:[%s3 + $0xc] sm:$0xf]
    %v188 = vld [vmem:[%s3 + $0x10] sm:$0xf]
    %v189 = vld [vmem:[%s3 + $0x14] sm:$0xf]
    %v190 = vld [vmem:[%s3 + $0x18] sm:$0xf]
    %v191 = vld [vmem:[%s3 + $0x1c] sm:$0xf]
    %v192 = vld [vmem:[%s3 + $0x20] sm:$0xf]
    %v193 = vld [vmem:[%s3 + $0x24] sm:$0xf]
    %v194 = vld [vmem:[%s3 + $0x28] sm:$0xf]
    %v195 = vld [vmem:[%s3 + $0x2c] sm:$0xf]
    %v196 = vld [vmem:[%s3 + $0x30] sm:$0xf]
    %v197 = vld [vmem:[%s3 + $0x34] sm:$0xf]
    %v198 = vld [vmem:[%s3 + $0x38] sm:$0xf]
    %v199 = vld [vmem:[%s3 + $0x3c] sm:$0xf]
    %v200 = vld [vmem:[%s3 + $0x40] sm:$0xf]
    %v201 = vld [vmem:[%s3 + $0x44] sm:$0xf]
    %v202 = vld [vmem:[%s3 + $0x48] sm:$0xf]
    %v203 = vld [vmem:[%s3 + $0x4c] sm:$0xf]
    %v204 = vld [vmem:[%s3 + $0x50] sm:$0xf]
    %v205 = vld [vmem:[%s3 + $0x54] sm:$0xf]
    %v206 = vld [vmem:[%s3 + $0x58] sm:$0xf]
    %v207 = vld [vmem:[%s3 + $0x5c] sm:$0xf]
    %v208 = vld [vmem:[%s3 + $0x60] sm:$0xf]
    %v209 = vld [vmem:[%s3 + $0x64] sm:$0xf]
    %v210 = vld [vmem:[%s3 + $0x68] sm:$0xf]
    %v211 = vld [vmem:[%s3 + $0x6c] sm:$0xf]
    %v212 = vld [vmem:[%s3 + $0x70] sm:$0xf]
    %v213 = vld [vmem:[%s3 + $0x74] sm:$0xf]
    %v214 = vld [vmem:[%s3 + $0x78] sm:$0xf]
    %v215 = vld [vmem:[%s3 + $0x7c] sm:$0xf]
    %v216 = vld [vmem:[#allocation2] sm:$0x1]
    %v218 = vperm.slane %v216, 0
    %v252 = vunpack.c.l.b16 %v184
    %v253 = vunpack.c.l.b16 %v185
    %v254 = vunpack.c.l.b16 %v186
    %v255 = vunpack.c.l.b16 %v187
    %v256 = vunpack.c.l.b16 %v188
    %v257 = vunpack.c.l.b16 %v189
    %v258 = vunpack.c.l.b16 %v190
    %v259 = vunpack.c.l.b16 %v191
    %v260 = vunpack.c.l.b16 %v192
    %v261 = vunpack.c.l.b16 %v193
    %v262 = vunpack.c.l.b16 %v194
    %v263 = vunpack.c.l.b16 %v195
    %v264 = vunpack.c.l.b16 %v196
    %v265 = vunpack.c.l.b16 %v197
    %v266 = vunpack.c.l.b16 %v198
    %v267 = vunpack.c.l.b16 %v199
    %v268 = vunpack.c.l.b16 %v200
    %v269 = vunpack.c.l.b16 %v201
    %v270 = vunpack.c.l.b16 %v202
    %v271 = vunpack.c.l.b16 %v203
    %v272 = vunpack.c.l.b16 %v204
    %v273 = vunpack.c.l.b16 %v205
    %v274 = vunpack.c.l.b16 %v206
    %v275 = vunpack.c.l.b16 %v207
    %v276 = vunpack.c.l.b16 %v208
    %v277 = vunpack.c.l.b16 %v209
    %v278 = vunpack.c.l.b16 %v210
    %v279 = vunpack.c.l.b16 %v211
    %v280 = vunpack.c.l.b16 %v212
    %v281 = vunpack.c.l.b16 %v213
    %v282 = vunpack.c.l.b16 %v214
    %v283 = vunpack.c.l.b16 %v215
    %v284 = vpack.c.b16 %v253, %v252
    %v285 = vpack.c.b16 %v255, %v254
    %v286 = vpack.c.b16 %v257, %v256
    %v287 = vpack.c.b16 %v259, %v258
    %v288 = vpack.c.b16 %v261, %v260
    %v289 = vpack.c.b16 %v263, %v262
    %v290 = vpack.c.b16 %v265, %v264
    %v291 = vpack.c.b16 %v267, %v266
    %v292 = vpack.c.b16 %v269, %v268
    %v293 = vpack.c.b16 %v271, %v270
    %v294 = vpack.c.b16 %v273, %v272
    %v295 = vpack.c.b16 %v275, %v274
    %v296 = vpack.c.b16 %v277, %v276
    %v297 = vpack.c.b16 %v279, %v278
    %v298 = vpack.c.b16 %v281, %v280
    %v299 = vpack.c.b16 %v283, %v282
    %316 = vmatpush.bf16.msra.mxu0 %v291
    %317 = vmatpush.bf16.msra.mxu0 %v290
    %318 = vmatpush.bf16.msra.mxu0 %v289
    %319 = vmatpush.bf16.msra.mxu0 %v288
    %320 = vmatpush.bf16.msra.mxu0 %v287
    %321 = vmatpush.bf16.msra.mxu0 %v286
    %322 = vmatpush.bf16.msra.mxu0 %v285
    %323 = vmatpush.bf16.msra.mxu0 %v284
    %324 = vmatmul.bf16.gmra.mxu0 %v176
    %v325 = vpop.f32.mrf.mxu0
    %v326 = vadd.f32 %v218, %v325
    %v327 = vpop.f32.mrf.mxu0
    %v328 = vadd.f32 %v218, %v327
    %329 = vmatmul.bf16.gmra.mxu0 %v178
    %v330 = vpop.f32.mrf.mxu0
    %v331 = vadd.f32 %v218, %v330
    %v332 = vpop.f32.mrf.mxu0
    %v333 = vadd.f32 %v218, %v332
    %334 = vmatmul.bf16.gmra.mxu0 %v180
    %v335 = vpop.f32.mrf.mxu0
    %v336 = vadd.f32 %v218, %v335
    %v337 = vpop.f32.mrf.mxu0
    %v338 = vadd.f32 %v218, %v337
    %339 = vmatmul.bf16.gmra.mxu0 %v182
    %v340 = vpop.f32.mrf.mxu0
    %v341 = vadd.f32 %v218, %v340
    %v342 = vpop.f32.mrf.mxu0
    %v343 = vadd.f32 %v218, %v342
    %344 = vdwg.mxu0
    %345 = vmatpush.bf16.msra.mxu0 %v299
    %346 = vmatpush.bf16.msra.mxu0 %v298
    %347 = vmatpush.bf16.msra.mxu0 %v297
    %348 = vmatpush.bf16.msra.mxu0 %v296
    %349 = vmatpush.bf16.msra.mxu0 %v295
    %350 = vmatpush.bf16.msra.mxu0 %v294
    %351 = vmatpush.bf16.msra.mxu0 %v293
    %352 = vmatpush.bf16.msra.mxu0 %v292
    %353 = vmatmul.bf16.gmra.mxu0 %v177
    %v354 = vpop.f32.mrf.mxu0
    %v355 = vadd.f32 %v326, %v354
    %v356 = vpop.f32.mrf.mxu0
    %v357 = vadd.f32 %v328, %v356
    %358 = vmatmul.bf16.gmra.mxu0 %v179
    %v359 = vpop.f32.mrf.mxu0
    %v360 = vadd.f32 %v331, %v359
    %v361 = vpop.f32.mrf.mxu0
    %v362 = vadd.f32 %v333, %v361
    %363 = vmatmul.bf16.gmra.mxu0 %v181
    %v364 = vpop.f32.mrf.mxu0
    %v365 = vadd.f32 %v336, %v364
    %v366 = vpop.f32.mrf.mxu0
    %v367 = vadd.f32 %v338, %v366
    %368 = vmatmul.bf16.gmra.mxu0 %v183
    %v369 = vpop.f32.mrf.mxu0
    %v370 = vadd.f32 %v341, %v369
    %v371 = vpop.f32.mrf.mxu0
    %v372 = vadd.f32 %v343, %v371
    %373 = vdwg.mxu0
    %v374 = vmax.f32 %v355, 0.0
    %v375 = vmax.f32 %v357, 0.0
    %v376 = vmax.f32 %v360, 0.0
    %v377 = vmax.f32 %v362, 0.0
    %v378 = vmax.f32 %v365, 0.0
    %v379 = vmax.f32 %v367, 0.0
    %v380 = vmax.f32 %v370, 0.0
    %v381 = vmax.f32 %v372, 0.0
    %v382 = vpack.c.bf16 %v375, %v374
    %v383 = vpack.c.bf16 %v377, %v376
    %v384 = vpack.c.bf16 %v379, %v378
    %v385 = vpack.c.bf16 %v381, %v380
    %v386 = vld [vmem:[%s5] sm:$0xf]
    %v387 = vld [vmem:[%s5 + $0x4] sm:$0xf]
    %v388 = vld [vmem:[%s5 + $0x8] sm:$0xf]
    %v389 = vld [vmem:[%s5 + $0xc] sm:$0xf]
    %v390 = vld [vmem:[%s5 + $0x10] sm:$0xf]
    %v391 = vld [vmem:[%s5 + $0x14] sm:$0xf]
    %v392 = vld [vmem:[%s5 + $0x18] sm:$0xf]
    %v393 = vld [vmem:[%s5 + $0x1c] sm:$0xf]
    %v394 = vld [vmem:[%s5 + $0x20] sm:$0xf]
    %v395 = vld [vmem:[%s5 + $0x24] sm:$0xf]
    %v396 = vld [vmem:[%s5 + $0x28] sm:$0xf]
    %v397 = vld [vmem:[%s5 + $0x2c] sm:$0xf]
    %v398 = vld [vmem:[%s5 + $0x30] sm:$0xf]
    %v399 = vld [vmem:[%s5 + $0x34] sm:$0xf]
    %v400 = vld [vmem:[%s5 + $0x38] sm:$0xf]
    %v401 = vld [vmem:[%s5 + $0x3c] sm:$0xf]
    %v402 = vld [vmem:[%s6] sm:$0x1]
    %v404 = vperm.slane %v402, 0
    %v422 = vunpack.c.l.b16 %v386
    %v423 = vunpack.c.l.b16 %v387
    %v424 = vunpack.c.l.b16 %v388
    %v425 = vunpack.c.l.b16 %v389
    %v426 = vunpack.c.l.b16 %v390
    %v427 = vunpack.c.l.b16 %v391
    %v428 = vunpack.c.l.b16 %v392
    %v429 = vunpack.c.l.b16 %v393
    %v430 = vunpack.c.l.b16 %v394
    %v431 = vunpack.c.l.b16 %v395
    %v432 = vunpack.c.l.b16 %v396
    %v433 = vunpack.c.l.b16 %v397
    %v434 = vunpack.c.l.b16 %v398
    %v435 = vunpack.c.l.b16 %v399
    %v436 = vunpack.c.l.b16 %v400
    %v437 = vunpack.c.l.b16 %v401
    %v438 = vpack.c.b16 %v423, %v422
    %v439 = vpack.c.b16 %v425, %v424
    %v440 = vpack.c.b16 %v427, %v426
    %v441 = vpack.c.b16 %v429, %v428
    %v442 = vpack.c.b16 %v431, %v430
    %v443 = vpack.c.b16 %v433, %v432
    %v444 = vpack.c.b16 %v435, %v434
    %v445 = vpack.c.b16 %v437, %v436
    %454 = vmatpush.bf16.msra.mxu0 %v445
    %455 = vmatpush.bf16.msra.mxu0 %v444
    %456 = vmatpush.bf16.msra.mxu0 %v443
    %457 = vmatpush.bf16.msra.mxu0 %v442
    %458 = vmatpush.bf16.msra.mxu0 %v441
    %459 = vmatpush.bf16.msra.mxu0 %v440
    %460 = vmatpush.bf16.msra.mxu0 %v439
    %461 = vmatpush.bf16.msra.mxu0 %v438
    %462 = vmatmul.bf16.gmra.mxu0 %v382
    %v463 = vpop.f32.mrf.mxu0
    %v464 = vadd.f32 %v404, %v463
    %v465 = vpop.f32.mrf.mxu0
    %v466 = vadd.f32 %v404, %v465
    %467 = vmatmul.bf16.gmra.mxu0 %v383
    %v468 = vpop.f32.mrf.mxu0
    %v469 = vadd.f32 %v404, %v468
    %v470 = vpop.f32.mrf.mxu0
    %v471 = vadd.f32 %v404, %v470
    %472 = vmatmul.bf16.gmra.mxu0 %v384
    %v473 = vpop.f32.mrf.mxu0
    %v474 = vadd.f32 %v404, %v473
    %v475 = vpop.f32.mrf.mxu0
    %v476 = vadd.f32 %v404, %v475
    %477 = vmatmul.bf16.gmra.mxu0 %v385
    %v478 = vpop.f32.mrf.mxu0
    %v479 = vadd.f32 %v404, %v478
    %v480 = vpop.f32.mrf.mxu0
    %v481 = vadd.f32 %v404, %v480
    %482 = vdwg.mxu0
    %v483 = vmax.f32 %v464, 0.0
    %v484 = vmax.f32 %v466, 0.0
    %v485 = vmax.f32 %v469, 0.0
    %v486 = vmax.f32 %v471, 0.0
    %v487 = vmax.f32 %v474, 0.0
    %v488 = vmax.f32 %v476, 0.0
    %v489 = vmax.f32 %v479, 0.0
    %v490 = vmax.f32 %v481, 0.0
    %v491 = vpack.c.bf16 %v484, %v483
    %v492 = vpack.c.bf16 %v486, %v485
    %v493 = vpack.c.bf16 %v488, %v487
    %v494 = vpack.c.bf16 %v490, %v489
    %v495 = vld [vmem:[%s7] sm:$0xf]
    %v496 = vld [vmem:[%s7 + $0x4] sm:$0xf]
    %v497 = vld [vmem:[%s7 + $0x8] sm:$0xf]
    %v498 = vld [vmem:[%s7 + $0xc] sm:$0xf]
    %v499 = vld [vmem:[%s7 + $0x10] sm:$0xf]
    %v500 = vld [vmem:[%s7 + $0x14] sm:$0xf]
    %v501 = vld [vmem:[%s7 + $0x18] sm:$0xf]
    %v502 = vld [vmem:[%s7 + $0x1c] sm:$0xf]
    %v511 = vunpack.c.l.b16 %v495
    %v512 = vunpack.c.l.b16 %v496
    %v513 = vunpack.c.l.b16 %v497
    %v514 = vunpack.c.l.b16 %v498
    %v515 = vunpack.c.l.b16 %v499
    %v516 = vunpack.c.l.b16 %v500
    %v517 = vunpack.c.l.b16 %v501
    %v518 = vunpack.c.l.b16 %v502
    %v519 = vpack.c.b16 %v512, %v511
    %v520 = vpack.c.b16 %v514, %v513
    %v521 = vpack.c.b16 %v516, %v515
    %v522 = vpack.c.b16 %v518, %v517
    %vm527 = vcmask 523264
    %v529 = vsel %vm527, %v491, 0
    %v532 = vsel %vm527, %v492, 0
    %v535 = vsel %vm527, %v493, 0
    %v538 = vsel %vm527, %v494, 0
    %540 = vmatpush.bf16.msra.mxu0 0
    %541 = vmatpush.bf16.msra.mxu0 0
    %542 = vmatpush.bf16.msra.mxu0 0
    %543 = vmatpush.bf16.msra.mxu0 0
    %544 = vmatpush.bf16.msra.mxu0 %v522
    %545 = vmatpush.bf16.msra.mxu0 %v521
    %546 = vmatpush.bf16.msra.mxu0 %v520
    %547 = vmatpush.bf16.msra.mxu0 %v519
    %548 = vmatmul.bf16.gmra.mxu0 %v529
    %v549 = vpop.f32.mrf.mxu0
    %v550 = vadd.f32 0.0, %v549
    %v551 = vpop.f32.mrf.mxu0
    %v552 = vadd.f32 0.0, %v551
    %553 = vmatmul.bf16.gmra.mxu0 %v532
    %v554 = vpop.f32.mrf.mxu0
    %v555 = vadd.f32 0.0, %v554
    %v556 = vpop.f32.mrf.mxu0
    %v557 = vadd.f32 0.0, %v556
    %558 = vmatmul.bf16.gmra.mxu0 %v535
    %v559 = vpop.f32.mrf.mxu0
    %v560 = vadd.f32 0.0, %v559
    %v561 = vpop.f32.mrf.mxu0
    %v562 = vadd.f32 0.0, %v561
    %563 = vmatmul.bf16.gmra.mxu0 %v538
    %v564 = vpop.f32.mrf.mxu0
    %v565 = vadd.f32 0.0, %v564
    %v566 = vpop.f32.mrf.mxu0
    %v567 = vadd.f32 0.0, %v566
    %568 = vdwg.mxu0
    %v569 = vld [vmem:[%s8] sm:$0x1]
    %v571 = vperm.slane %v569, 0
    %v573 = vadd.f32 %v550, %v571
    %v574 = vadd.f32 %v552, %v571
    %v575 = vadd.f32 %v555, %v571
    %v576 = vadd.f32 %v557, %v571
    %v577 = vadd.f32 %v560, %v571
    %v578 = vadd.f32 %v562, %v571
    %v579 = vadd.f32 %v565, %v571
    %v580 = vadd.f32 %v567, %v571
    %vm581 = vcmask 48128
    %582 = vst.msk [vmem:[%s9] sm:$0xff] %vm581, %v573
    %583 = vst.msk [vmem:[%s9 + $0x8] sm:$0xff] %vm581, %v574
    %584 = vst.msk [vmem:[%s9 + $0x10] sm:$0xff] %vm581, %v575
    %585 = vst.msk [vmem:[%s9 + $0x18] sm:$0xff] %vm581, %v576
    %586 = vst.msk [vmem:[%s9 + $0x20] sm:$0xff] %vm581, %v577
    %587 = vst.msk [vmem:[%s9 + $0x28] sm:$0xff] %vm581, %v578
    %588 = vst.msk [vmem:[%s9 + $0x30] sm:$0xff] %vm581, %v579
    %589 = vst.msk [vmem:[%s9 + $0x38] sm:$0xff] %vm581, %v580
    // Predicated region
    $region42: #{tpu_custom_call.1} parent=1 // pred_check
      _
    $region43: #{tpu_custom_call.1} parent=1 // pred_check_branch
      %591 = sbr.rel (0) target = $region45
    $region44: #{tpu_custom_call.1} parent=1 // pred_region
      _
    $region45: #{tpu_custom_call.1} parent=1 // pred_fallthru
      _
    // Predicated region
    $region46: #{tpu_custom_call.1} parent=1 // pred_check
      _
    $region47: #{tpu_custom_call.1} parent=1 // pred_check_branch
      %593 = sbr.rel (0) target = $region49
    $region48: #{tpu_custom_call.1} parent=1 // pred_region
      _
    $region49: #{tpu_custom_call.1} parent=1 // pred_fallthru
      _
    %594 = vsyncpa [#allocation3], 1

</llo_original>
